<compile_context>
chip_gen: v6e
topology: v6e:2x2x1
jax: 0.10.0
libtpu: 0.0.40
codegen_flags: <defaults>
</compile_context>

<pallas_src>
import functools
import math

import jax
import jax.numpy as jnp
from jax.experimental import pallas as pl
from jax.experimental.pallas import tpu as pltpu

_MIB = 1024 * 1024


def _round_up(a, b):
    return ((a + b - 1) // b) * b


def _gelu(h, approximate):
    if approximate:
        # tanh approximation -> EUP (own VLIW slot, overlaps the MXU)
        c = math.sqrt(2.0 / math.pi)
        return 0.5 * h * (1.0 + jnp.tanh(c * (h + 0.044715 * h * h * h)))
    # exact erf GELU (matches torch.nn.GELU() default)
    return 0.5 * h * (1.0 + jax.lax.erf(h * (1.0 / math.sqrt(2.0))))


# --------------------------------- kernels ---------------------------------

def ffn_resident_kernel(x_ref, w1_ref, b1_ref, w2_ref, b2_ref, o_ref, *,
                        compute_dtype, approximate_gelu):
    """Whole W1/W2 resident in VMEM; one row tile per grid step."""
    x = x_ref[...].astype(compute_dtype)                                # in-kernel cast
    h = jnp.dot(x, w1_ref[...], preferred_element_type=jnp.float32)     # (tm, H) f32
    h = _gelu(h + b1_ref[...], approximate_gelu)                        # f32 bias + GELU
    y = jnp.dot(h.astype(w2_ref.dtype), w2_ref[...],
                preferred_element_type=jnp.float32)                     # (tm, D_out_p) f32
    o_ref[...] = (y + b2_ref[...]).astype(o_ref.dtype)


def ffn_htiled_kernel(x_ref, w1_ref, b1_ref, w2_ref, b2_ref, o_ref, acc_ref, *,
                      compute_dtype, approximate_gelu):
    """Hidden dim tiled over the last grid axis ("arbitrary") with an f32 accumulator."""
    k = pl.program_id(1)

    @pl.when(k == 0)
    def _():
        acc_ref[...] = jnp.zeros_like(acc_ref)

    x = x_ref[...].astype(compute_dtype)
    h = jnp.dot(x, w1_ref[...], preferred_element_type=jnp.float32)     # (tm, th) f32
    h = _gelu(h + b1_ref[...], approximate_gelu)                        # per-block GELU
    acc_ref[...] += jnp.dot(h.astype(w2_ref.dtype), w2_ref[...],
                            preferred_element_type=jnp.float32)

    @pl.when(k == pl.num_programs(1) - 1)
    def _():
        o_ref[...] = (acc_ref[...] + b2_ref[...]).astype(o_ref.dtype)


# --------------------------------- wrapper ---------------------------------

def _default_vmem_limit():
    try:
        cap = pltpu.get_tpu_info().vmem_capacity_bytes
        # ~96 MiB on v5e/v6e (128 MiB physical), ~48 MiB on v7x (64 MiB physical)
        return max(32 * _MIB, (cap * 3) // 4)
    except Exception:
        return 48 * _MIB  # safe on every generation


def feed_forward(x, w1, b1, w2, b2, *, tm=None, hidden_block=None,
                 compute_dtype=jnp.bfloat16, approximate_gelu=False,
                 out_dtype=None, vmem_limit_bytes=None):
    N, D_in = x.shape
    H = w1.shape[1]
    D_out = w2.shape[1]
    out_dtype = out_dtype or x.dtype          # pass bfloat16 to halve writeback traffic
    if vmem_limit_bytes is None:
        vmem_limit_bytes = _default_vmem_limit()

    # ---- lane-dense output: pad D_out on the weights only (zeros, sliced off after) ----
    lane = 256 if D_out > 128 else 128        # 256-wide MXU on v6e/v7x; don't double tiny D_out
    D_out_p = _round_up(D_out, lane)
    if D_out_p != D_out:
        w2 = jnp.pad(w2, ((0, 0), (0, D_out_p - D_out)))
        b2 = jnp.pad(b2, ((0, 0), (0, D_out_p - D_out)))

    # dtype plumbing: matmul operands in compute_dtype, biases/accumulation in f32.
    # (Weight casts are no-ops if callers pre-cast once at init; x is cast in-kernel.)
    w1c = w1.astype(compute_dtype)
    w2c = w2.astype(compute_dtype)
    b1f = b1.astype(jnp.float32)
    b2f = b2.astype(jnp.float32)

    xb = jnp.dtype(x.dtype).itemsize
    cb = jnp.dtype(compute_dtype).itemsize
    ob = jnp.dtype(out_dtype).itemsize

    # ---- row tile: big, multiple of 8 sublanes; no padding of x (partial block masked) ----
    if tm is None:
        tm = 1024 if vmem_limit_bytes >= 96 * _MIB else 512
    tm_eff = max(8, min(tm, _round_up(N, 8)))
    # v7x megacore: guarantee >= 2 row tiles when N is big enough to make it worthwhile
    if N >= 512 and pl.cdiv(N, tm_eff) < 2:
        tm_eff = _round_up(pl.cdiv(N, 2), 256)
    n_row = pl.cdiv(N, tm_eff)

    budget = int(vmem_limit_bytes * 0.9)

    def resident_bytes(tm_):
        return (2 * tm_ * D_in * xb                    # x tile (double-buffered)
                + D_in * H * cb + H * 4                # W1 + b1 (single-buffered)
                + H * D_out_p * cb + D_out_p * 4       # W2 + b2 (single-buffered)
                + 2 * tm_ * D_out_p * ob               # out tile (double-buffered)
                + tm_ * H * (4 + cb))                  # h in f32 + compute-dtype copy

    def htiled_bytes(tm_, th_):
        return (2 * tm_ * D_in * xb
                + 2 * (D_in * th_ * cb + th_ * 4)      # W1/b1 blocks (double-buffered)
                + 2 * th_ * D_out_p * cb + D_out_p * 4
                + 2 * tm_ * D_out_p * ob
                + tm_ * D_out_p * 4                    # f32 accumulator scratch
                + tm_ * th_ * (4 + cb))

    # ---- pick the hidden tile th (th == H -> fully resident weights) ----
    if hidden_block is not None:
        th = min(hidden_block, H)
        if th != H and (H % th != 0 or th % 128 != 0):
            th = H        # partial / misaligned hidden blocks would corrupt the reduction
    elif resident_bytes(tm_eff) <= budget:
        th = H
    else:
        th = None
        for cand in (4096, 2048, 1024, 512, 256, 128):
            if cand < H and H % cand == 0 and htiled_bytes(tm_eff, cand) <= budget:
                th = cand
                break
        if th is None:
            # TODO(synk): zero-pad H to a 256 multiple for arbitrary H at huge dims.
            th = H

    kw = dict(compute_dtype=compute_dtype, approximate_gelu=approximate_gelu)

    def build_call(single_buffer_const):
        def const_spec(shape, index_map):
            if single_buffer_const:
                return pl.BlockSpec(shape, index_map, pipeline_mode=pl.Buffered(1))
            return pl.BlockSpec(shape, index_map)

        if th >= H:
            # ---------- fully-resident weights ----------
            grid = (n_row,)
            kernel = functools.partial(ffn_resident_kernel, **kw)
            in_specs = [
                pl.BlockSpec((tm_eff, D_in), lambda i: (i, 0)),
                const_spec((D_in, H), lambda i: (0, 0)),         # grid-invariant -> 1 buffer
                const_spec((1, H), lambda i: (0, 0)),
                const_spec((H, D_out_p), lambda i: (0, 0)),
                const_spec((1, D_out_p), lambda i: (0, 0)),
            ]
            out_specs = pl.BlockSpec((tm_eff, D_out_p), lambda i: (i, 0))
            scratch = []
            dims = ("parallel",)
        else:
            # ---------- hidden-dim tiled reduction (v7x-sized weights) ----------
            n_h = pl.cdiv(H, th)
            grid = (n_row, n_h)
            kernel = functools.partial(ffn_htiled_kernel, **kw)
            in_specs = [
                pl.BlockSpec((tm_eff, D_in), lambda i, k: (i, 0)),
                pl.BlockSpec((D_in, th), lambda i, k: (0, k)),
                pl.BlockSpec((1, th), lambda i, k: (0, k)),
                pl.BlockSpec((th, D_out_p), lambda i, k: (k, 0)),
                const_spec((1, D_out_p), lambda i, k: (0, 0)),   # only b2 is grid-invariant
            ]
            out_specs = pl.BlockSpec((tm_eff, D_out_p), lambda i, k: (i, 0))
            scratch = [pltpu.VMEM((tm_eff, D_out_p), jnp.float32)]
            dims = ("parallel", "arbitrary")

        return pl.pallas_call(
            kernel,
            out_shape=jax.ShapeDtypeStruct((N, D_out_p), out_dtype),
            grid_spec=pltpu.PrefetchScalarGridSpec(
                num_scalar_prefetch=0,
                grid=grid,
                in_specs=in_specs,
                out_specs=out_specs,
                scratch_shapes=scratch,
            ),
            compiler_params=pltpu.CompilerParams(
                dimension_semantics=dims,
                vmem_limit_bytes=int(vmem_limit_bytes),
            ),
        )

    try:
        out = build_call(True)(x, w1c, b1f, w2c, b2f)
    except Exception:
        # Fallback if this jax/libtpu build rejects pipeline_mode=pl.Buffered(1).
        out = build_call(False)(x, w1c, b1f, w2c, b2f)

    return out if D_out_p == D_out else out[:, :D_out]


def init_params(key, dim, hidden_dim_multiplier, input_dim_multiplier=1):
    """Deterministic PyTorch-style (uniform +-1/sqrt(fan_in)) Linear init."""
    input_dim = int(dim * input_dim_multiplier)
    hidden_dim = int(dim * hidden_dim_multiplier)
    k1, k2, k3, k4 = jax.random.split(key, 4)

    bound1 = 1.0 / math.sqrt(input_dim)
    w1 = jax.random.uniform(k1, (input_dim, hidden_dim), jnp.float32, -bound1, bound1)
    b1 = jax.random.uniform(k2, (1, hidden_dim), jnp.float32, -bound1, bound1)

    bound2 = 1.0 / math.sqrt(hidden_dim)
    w2 = jax.random.uniform(k3, (hidden_dim, dim), jnp.float32, -bound2, bound2)
    b2 = jax.random.uniform(k4, (1, dim), jnp.float32, -bound2, bound2)
    return w1, b1, w2, b2


if __name__ == "__main__":
    key = jax.random.PRNGKey(0)
    kp1, kx1, kp2, kx2 = jax.random.split(key, 4)

    # ---- config 1: module defaults (dim=32, hidden_mult=4 -> H=128), resident-weight path
    dim, mult, N = 32, 4, 16
    w1, b1, w2, b2 = init_params(kp1, dim, mult)
    x = jax.random.normal(kx1, (N, dim), jnp.float32)
    ref = jax.nn.gelu(x @ w1 + b1, approximate=False) @ w2 + b2

    out = jax.block_until_ready(feed_forward(x, w1, b1, w2, b2))     # bf16 operands, f32 acc
    assert out.shape == (N, dim)
    assert jnp.allclose(out, ref, atol=3e-2, rtol=3e-2)

    out_f32 = jax.block_until_ready(
        feed_forward(x, w1, b1, w2, b2, compute_dtype=jnp.float32))  # exact-f32 path
    assert out_f32.shape == (N, dim)
    assert jnp.allclose(out_f32, ref, atol=1e-5, rtol=1e-5)

    # ---- config 2: exercise the hidden-tiled accumulator path (grid=(2, 2)) at small dims
    dim2, mult2, N2 = 128, 4, 64                                     # H = 512
    w1b, b1b, w2b, b2b = init_params(kp2, dim2, mult2)
    x2 = jax.random.normal(kx2, (N2, dim2), jnp.float32)
    ref2 = jax.nn.gelu(x2 @ w1b + b1b, approximate=False) @ w2b + b2b

    out2 = jax.block_until_ready(
        feed_forward(x2, w1b, b1b, w2b, b2b, tm=32, hidden_block=256,
                     compute_dtype=jnp.float32))
    assert out2.shape == (N2, dim2)
    assert jnp.allclose(out2, ref2, atol=1e-4, rtol=1e-4)

    print("KERNEL_OK")
</pallas_src>

<mosaic_0001>
module attributes {stable_mosaic.version = 11 : i64} {
  func.func @ffn_resident_kernel(%arg0: i32, %arg1: memref<16x32xf32, #tpu.memory_space<vmem>>, %arg2: memref<32x128xbf16, #tpu.memory_space<vmem>>, %arg3: memref<1x128xf32, #tpu.memory_space<vmem>>, %arg4: memref<128x128xbf16, #tpu.memory_space<vmem>>, %arg5: memref<1x128xf32, #tpu.memory_space<vmem>>, %arg6: memref<16x128xf32, #tpu.memory_space<vmem>>) attributes {dimension_semantics = [#tpu.dimension_semantics<parallel>], iteration_bounds = array<i64: 1>, scalar_prefetch = 0 : i64, scratch_operands = 0 : i64, tpu.core_type = #tpu.core_type<tc>, window_params = [{transform_indices = @transform_0, window_bounds = array<i64: 16, 32>}, {pipeline_mode = #tpu.pipeline_mode<synchronous>, transform_indices = @transform_1, window_bounds = array<i64: 32, 128>}, {pipeline_mode = #tpu.pipeline_mode<synchronous>, transform_indices = @transform_2, window_bounds = array<i64: 1, 128>}, {pipeline_mode = #tpu.pipeline_mode<synchronous>, transform_indices = @transform_3, window_bounds = array<i64: 128, 128>}, {pipeline_mode = #tpu.pipeline_mode<synchronous>, transform_indices = @transform_4, window_bounds = array<i64: 1, 128>}, {transform_indices = @transform_5, window_bounds = array<i64: 16, 128>}]} {
    %c0 = arith.constant 0 : index
    %c0_0 = arith.constant 0 : index
    %0 = vector.load %arg1[%c0, %c0_0] : memref<16x32xf32, #tpu.memory_space<vmem>>, vector<16x32xf32>
    %1 = arith.truncf %0 : vector<16x32xf32> to vector<16x32xbf16>
    %c0_1 = arith.constant 0 : index
    %c0_2 = arith.constant 0 : index
    %2 = vector.load %arg2[%c0_1, %c0_2] : memref<32x128xbf16, #tpu.memory_space<vmem>>, vector<32x128xbf16>
    %cst = arith.constant dense<0.000000e+00> : vector<16x128xf32>
    %3 = tpu.matmul %1, %2, %cst {dimension_numbers = #tpu.dot_dimension_numbers<[1], [0], [0], [1], [0, 0, 1, 1], [], []>} : vector<16x32xbf16>, vector<32x128xbf16>, vector<16x128xf32> -> vector<16x128xf32>
    %c0_3 = arith.constant 0 : index
    %c0_4 = arith.constant 0 : index
    %4 = vector.load %arg3[%c0_3, %c0_4] : memref<1x128xf32, #tpu.memory_space<vmem>>, vector<1x128xf32>
    %5 = vector.broadcast %4 : vector<1x128xf32> to vector<16x128xf32>
    %6 = arith.addf %3, %5 : vector<16x128xf32>
    %cst_5 = arith.constant 5.000000e-01 : f32
    %7 = vector.broadcast %cst_5 : f32 to vector<16x128xf32>
    %8 = arith.mulf %7, %6 : vector<16x128xf32>
    %cst_6 = arith.constant 0.707106769 : f32
    %9 = vector.broadcast %cst_6 : f32 to vector<16x128xf32>
    %10 = arith.mulf %6, %9 : vector<16x128xf32>
    %11 = math.erf %10 : vector<16x128xf32>
    %cst_7 = arith.constant 1.000000e+00 : f32
    %12 = vector.broadcast %cst_7 : f32 to vector<16x128xf32>
    %13 = arith.addf %12, %11 : vector<16x128xf32>
    %14 = arith.mulf %8, %13 : vector<16x128xf32>
    %15 = arith.truncf %14 : vector<16x128xf32> to vector<16x128xbf16>
    %c0_8 = arith.constant 0 : index
    %c0_9 = arith.constant 0 : index
    %16 = vector.load %arg4[%c0_8, %c0_9] : memref<128x128xbf16, #tpu.memory_space<vmem>>, vector<128x128xbf16>
    %cst_10 = arith.constant dense<0.000000e+00> : vector<16x128xf32>
    %17 = tpu.matmul %15, %16, %cst_10 {dimension_numbers = #tpu.dot_dimension_numbers<[1], [0], [0], [1], [0, 0, 1, 1], [], []>} : vector<16x128xbf16>, vector<128x128xbf16>, vector<16x128xf32> -> vector<16x128xf32>
    %c0_11 = arith.constant 0 : index
    %c0_12 = arith.constant 0 : index
    %18 = vector.load %arg5[%c0_11, %c0_12] : memref<1x128xf32, #tpu.memory_space<vmem>>, vector<1x128xf32>
    %19 = vector.broadcast %18 : vector<1x128xf32> to vector<16x128xf32>
    %20 = arith.addf %17, %19 : vector<16x128xf32>
    %c0_13 = arith.constant 0 : index
    %c0_14 = arith.constant 0 : index
    %21 = vector.load %arg6[%c0_13, %c0_14] : memref<16x128xf32, #tpu.memory_space<vmem>>, vector<16x128xf32>
    tpu.vector_store %arg6[%c0_13, %c0_14], %20 {strides = array<i32>} : memref<16x128xf32, #tpu.memory_space<vmem>>, vector<16x128xf32>,
    return
  }
  func.func @transform_0(%arg0: i32) -> (i32, i32) {
    %c0_i32 = arith.constant 0 : i32
    %c0_i32_0 = arith.constant 0 : i32
    return %arg0, %c0_i32 : i32, i32
  }
  func.func @transform_1(%arg0: i32) -> (i32, i32) {
    %c0_i32 = arith.constant 0 : i32
    %c0_i32_0 = arith.constant 0 : i32
    %c0_i32_1 = arith.constant 0 : i32
    return %c0_i32, %c0_i32_0 : i32, i32
  }
  func.func @transform_2(%arg0: i32) -> (i32, i32) {
    %c0_i32 = arith.constant 0 : i32
    %c0_i32_0 = arith.constant 0 : i32
    %c0_i32_1 = arith.constant 0 : i32
    return %c0_i32, %c0_i32_0 : i32, i32
  }
  func.func @transform_3(%arg0: i32) -> (i32, i32) {
    %c0_i32 = arith.constant 0 : i32
    %c0_i32_0 = arith.constant 0 : i32
    %c0_i32_1 = arith.constant 0 : i32
    return %c0_i32, %c0_i32_0 : i32, i32
  }
  func.func @transform_4(%arg0: i32) -> (i32, i32) {
    %c0_i32 = arith.constant 0 : i32
    %c0_i32_0 = arith.constant 0 : i32
    %c0_i32_1 = arith.constant 0 : i32
    return %c0_i32, %c0_i32_0 : i32, i32
  }
  func.func @transform_5(%arg0: i32) -> (i32, i32) {
    %c0_i32 = arith.constant 0 : i32
    %c0_i32_0 = arith.constant 0 : i32
    return %arg0, %c0_i32 : i32, i32
  }
}

module attributes {stable_mosaic.version = 11 : i64} {
  func.func @ffn_resident_kernel(%arg0: i32, %arg1: memref<16x32xf32, #tpu.memory_space<vmem>>, %arg2: memref<32x128xbf16, #tpu.memory_space<vmem>>, %arg3: memref<1x128xf32, #tpu.memory_space<vmem>>, %arg4: memref<128x128xbf16, #tpu.memory_space<vmem>>, %arg5: memref<1x128xf32, #tpu.memory_space<vmem>>, %arg6: memref<16x128xf32, #tpu.memory_space<vmem>>) attributes {dimension_semantics = [#tpu.dimension_semantics<parallel>], iteration_bounds = array<i64: 1>, scalar_prefetch = 0 : i64, scratch_operands = 0 : i64, tpu.core_type = #tpu.core_type<tc>, window_params = [{transform_indices = @transform_0, window_bounds = array<i64: 16, 32>}, {pipeline_mode = #tpu.pipeline_mode<synchronous>, transform_indices = @transform_1, window_bounds = array<i64: 32, 128>}, {pipeline_mode = #tpu.pipeline_mode<synchronous>, transform_indices = @transform_2, window_bounds = array<i64: 1, 128>}, {pipeline_mode = #tpu.pipeline_mode<synchronous>, transform_indices = @transform_3, window_bounds = array<i64: 128, 128>}, {pipeline_mode = #tpu.pipeline_mode<synchronous>, transform_indices = @transform_4, window_bounds = array<i64: 1, 128>}, {transform_indices = @transform_5, window_bounds = array<i64: 16, 128>}]} {
    %c0 = arith.constant 0 : index
    %c0_0 = arith.constant 0 : index
    %0 = vector.load %arg1[%c0, %c0_0] : memref<16x32xf32, #tpu.memory_space<vmem>>, vector<16x32xf32>
    %1 = arith.truncf %0 : vector<16x32xf32> to vector<16x32xbf16>
    %c0_1 = arith.constant 0 : index
    %c0_2 = arith.constant 0 : index
    %2 = vector.load %arg2[%c0_1, %c0_2] : memref<32x128xbf16, #tpu.memory_space<vmem>>, vector<32x128xbf16>
    %cst = arith.constant dense<0.000000e+00> : vector<16x128xf32>
    %3 = tpu.matmul %1, %2, %cst {dimension_numbers = #tpu.dot_dimension_numbers<[1], [0], [0], [1], [0, 0, 1, 1], [], []>} : vector<16x32xbf16>, vector<32x128xbf16>, vector<16x128xf32> -> vector<16x128xf32>
    %c0_3 = arith.constant 0 : index
    %c0_4 = arith.constant 0 : index
    %4 = vector.load %arg3[%c0_3, %c0_4] : memref<1x128xf32, #tpu.memory_space<vmem>>, vector<1x128xf32>
    %5 = vector.broadcast %4 : vector<1x128xf32> to vector<16x128xf32>
    %6 = arith.addf %3, %5 : vector<16x128xf32>
    %cst_5 = arith.constant 5.000000e-01 : f32
    %7 = vector.broadcast %cst_5 : f32 to vector<16x128xf32>
    %8 = arith.mulf %7, %6 : vector<16x128xf32>
    %cst_6 = arith.constant 0.707106769 : f32
    %9 = vector.broadcast %cst_6 : f32 to vector<16x128xf32>
    %10 = arith.mulf %6, %9 : vector<16x128xf32>
    %11 = math.erf %10 : vector<16x128xf32>
    %cst_7 = arith.constant 1.000000e+00 : f32
    %12 = vector.broadcast %cst_7 : f32 to vector<16x128xf32>
    %13 = arith.addf %12, %11 : vector<16x128xf32>
    %14 = arith.mulf %8, %13 : vector<16x128xf32>
    %15 = arith.truncf %14 : vector<16x128xf32> to vector<16x128xbf16>
    %c0_8 = arith.constant 0 : index
    %c0_9 = arith.constant 0 : index
    %16 = vector.load %arg4[%c0_8, %c0_9] : memref<128x128xbf16, #tpu.memory_space<vmem>>, vector<128x128xbf16>
    %cst_10 = arith.constant dense<0.000000e+00> : vector<16x128xf32>
    %17 = tpu.matmul %15, %16, %cst_10 {dimension_numbers = #tpu.dot_dimension_numbers<[1], [0], [0], [1], [0, 0, 1, 1], [], []>} : vector<16x128xbf16>, vector<128x128xbf16>, vector<16x128xf32> -> vector<16x128xf32>
    %c0_11 = arith.constant 0 : index
    %c0_12 = arith.constant 0 : index
    %18 = vector.load %arg5[%c0_11, %c0_12] : memref<1x128xf32, #tpu.memory_space<vmem>>, vector<1x128xf32>
    %19 = vector.broadcast %18 : vector<1x128xf32> to vector<16x128xf32>
    %20 = arith.addf %17, %19 : vector<16x128xf32>
    %c0_13 = arith.constant 0 : index
    %c0_14 = arith.constant 0 : index
    %21 = vector.load %arg6[%c0_13, %c0_14] : memref<16x128xf32, #tpu.memory_space<vmem>>, vector<16x128xf32>
    tpu.vector_store %arg6[%c0_13, %c0_14], %20 {strides = array<i32>} : memref<16x128xf32, #tpu.memory_space<vmem>>, vector<16x128xf32>,
    return
  }
  func.func @transform_0(%arg0: i32) -> (i32, i32) {
    %c0_i32 = arith.constant 0 : i32
    %c0_i32_0 = arith.constant 0 : i32
    return %arg0, %c0_i32 : i32, i32
  }
  func.func @transform_1(%arg0: i32) -> (i32, i32) {
    %c0_i32 = arith.constant 0 : i32
    %c0_i32_0 = arith.constant 0 : i32
    %c0_i32_1 = arith.constant 0 : i32
    return %c0_i32, %c0_i32_0 : i32, i32
  }
  func.func @transform_2(%arg0: i32) -> (i32, i32) {
    %c0_i32 = arith.constant 0 : i32
    %c0_i32_0 = arith.constant 0 : i32
    %c0_i32_1 = arith.constant 0 : i32
    return %c0_i32, %c0_i32_0 : i32, i32
  }
  func.func @transform_3(%arg0: i32) -> (i32, i32) {
    %c0_i32 = arith.constant 0 : i32
    %c0_i32_0 = arith.constant 0 : i32
    %c0_i32_1 = arith.constant 0 : i32
    return %c0_i32, %c0_i32_0 : i32, i32
  }
  func.func @transform_4(%arg0: i32) -> (i32, i32) {
    %c0_i32 = arith.constant 0 : i32
    %c0_i32_0 = arith.constant 0 : i32
    %c0_i32_1 = arith.constant 0 : i32
    return %c0_i32, %c0_i32_0 : i32, i32
  }
  func.func @transform_5(%arg0: i32) -> (i32, i32) {
    %c0_i32 = arith.constant 0 : i32
    %c0_i32_0 = arith.constant 0 : i32
    return %arg0, %c0_i32 : i32, i32
  }
}

</mosaic_0001>

<llo_original>
// kernel: tpu_custom_call.1
$region0: #{tpu_custom_call.1}
  #allocation0 [shape = 'u32[]', space=smem, size = 0x4, offset = 0x4, fixed_abs, tag = 'smem constant byte address 0x4 - core index']
  #allocation1 [shape = 'u32[144,128]{1,0:T(1,128)}', space=vmem, size = 0x12000, scoped, tag = 'internal scratch']
  %s0 = inlined_call_operand.hbm [shape: f32[16,32], index: 0, kind: input, shape index: {}]
  %s1 = inlined_call_operand.hbm [shape: bf16[32,128], index: 1, kind: input, shape index: {}]
  %s2 = inlined_call_operand.vmem [shape: f32[1,128], index: 2, kind: input, shape index: {}]
  %s3 = inlined_call_operand.hbm [shape: bf16[128,128], index: 3, kind: input, shape index: {}]
  %s4 = inlined_call_operand.vmem [shape: f32[1,128], index: 4, kind: input, shape index: {}]
  %s5 = inlined_call_operand.hbm [shape: f32[16,128], index: 5, kind: output, shape index: {}]
  %s6 = sld [smem:[#allocation0]]
  $region42: #{tpu_custom_call.1} parent=0
    _
  %s8 = ssub.s32 1, %s6
  %s9 = scalar_select 0, %s8, %s6
  $region1: #{tpu_custom_call.1} parent=0
    #allocation2 [shape = 'u8[8192]{0}', space=vmem, size = 0x2000, scoped, tag = 'input window, operand 0, single buffered']
    #allocation3 [shape = 's32[1]{0}', space=sflag, size = 0x4, scoped, tag = 'scoped memory for tpu_custom_call.1']
    #allocation4 [shape = 's32[1]{0}', space=sflag, size = 0x4, scoped, tag = 'scoped memory for tpu_custom_call.1']
    #allocation5 [shape = 'u8[8192]{0}', space=vmem, size = 0x2000, scoped, tag = 'input window, operand 1, single buffered']
    #allocation6 [shape = 's32[1]{0}', space=sflag, size = 0x4, scoped, tag = 'scoped memory for tpu_custom_call.1']
    #allocation7 [shape = 'u8[32768]{0}', space=vmem, size = 0x8000, scoped, tag = 'input window, operand 3, single buffered']
    #allocation8 [shape = 'u8[8192]{0}', space=vmem, size = 0x2000, scoped, tag = 'output window, operand 0, single buffered']
    %10 = vsyncpa [#allocation3], 0
    %11 = vsyncpa [#allocation6], 0
    %12 = vsyncpa [#allocation4], 0
    // Predicated region
    $region2: #{tpu_custom_call.1} parent=1 // pred_check
      _
    $region3: #{tpu_custom_call.1} parent=1 // pred_check_branch
      %14 = sbr.rel (0) target = $region5
    $region4: #{tpu_custom_call.1} parent=1 // pred_region
      %s16 = ssub.s32 256, 256
      %17 = vsyncadd [#allocation3], %s16
      %s18 = sshll.u32 [#allocation2], 4
      %s19 = int_to_ptr.vmem [resolvable:$true] %s18
      %24 = dma.hbm_to_vmem [thread:$0]  %s0, 256, %s19, [#allocation3], 128, 128, 8
    $region5: #{tpu_custom_call.1} parent=1 // pred_fallthru
      _
    // Predicated region
    $region6: #{tpu_custom_call.1} parent=1 // pred_check
      _
    $region7: #{tpu_custom_call.1} parent=1 // pred_check_branch
      %26 = sbr.rel (0) target = $region9
    $region8: #{tpu_custom_call.1} parent=1 // pred_region
      %s28 = ssub.s32 256, 256
      %29 = vsyncadd [#allocation6], %s28
      %s30 = sshll.u32 [#allocation5], 4
      %s31 = int_to_ptr.vmem [resolvable:$true] %s30
      %36 = dma.hbm_to_vmem [thread:$0]  %s1, 256, %s31, [#allocation6], 64, 64, 4
    $region9: #{tpu_custom_call.1} parent=1 // pred_fallthru
      _
    // Predicated region
    $region10: #{tpu_custom_call.1} parent=1 // pred_check
      _
    $region11: #{tpu_custom_call.1} parent=1 // pred_check_branch
      %38 = sbr.rel (0) target = $region13
    $region12: #{tpu_custom_call.1} parent=1 // pred_region
      _
    $region13: #{tpu_custom_call.1} parent=1 // pred_fallthru
      _
    // Predicated region
    $region14: #{tpu_custom_call.1} parent=1 // pred_check
      _
    $region15: #{tpu_custom_call.1} parent=1 // pred_check_branch
      %40 = sbr.rel (0) target = $region17
    $region16: #{tpu_custom_call.1} parent=1 // pred_region
      %s42 = ssub.s32 1024, 1024
      %43 = vsyncadd [#allocation6], %s42
      %s44 = sshll.u32 [#allocation7], 4
      %s45 = int_to_ptr.vmem [resolvable:$true] %s44
      %50 = dma.hbm_to_vmem [thread:$0]  %s3, 1024, %s45, [#allocation6], 64, 64, 4
    $region17: #{tpu_custom_call.1} parent=1 // pred_fallthru
      _
    // Predicated region
    $region18: #{tpu_custom_call.1} parent=1 // pred_check
      _
    $region19: #{tpu_custom_call.1} parent=1 // pred_check_branch
      %52 = sbr.rel (0) target = $region21
    $region20: #{tpu_custom_call.1} parent=1 // pred_region
      _
    $region21: #{tpu_custom_call.1} parent=1 // pred_fallthru
      _
    // Predicated region
    $region22: #{tpu_custom_call.1} parent=1 // pred_check
      _
    $region23: #{tpu_custom_call.1} parent=1 // pred_check_branch
      %54 = sbr.rel (0) target = $region25
    $region24: #{tpu_custom_call.1} parent=1 // pred_region
      %55 = dma.done [#allocation3], 256
    $region25: #{tpu_custom_call.1} parent=1 // pred_fallthru
      _
    // Predicated region
    $region26: #{tpu_custom_call.1} parent=1 // pred_check
      _
    $region27: #{tpu_custom_call.1} parent=1 // pred_check_branch
      %57 = sbr.rel (0) target = $region29
    $region28: #{tpu_custom_call.1} parent=1 // pred_region
      %58 = dma.done [#allocation6], 256
    $region29: #{tpu_custom_call.1} parent=1 // pred_fallthru
      _
    // Predicated region
    $region30: #{tpu_custom_call.1} parent=1 // pred_check
      _
    $region31: #{tpu_custom_call.1} parent=1 // pred_check_branch
      %60 = sbr.rel (0) target = $region33
    $region32: #{tpu_custom_call.1} parent=1 // pred_region
      %61 = dma.done [#allocation6], 1024
    $region33: #{tpu_custom_call.1} parent=1 // pred_fallthru
      _
    %v63 = vld [vmem:[#allocation2] sm:$0xff]
    %v64 = vld [vmem:[#allocation2 + $0x8] sm:$0xff]
    %v65 = vpack.c.bf16 %v64, %v63
    %v66 = vld [vmem:[#allocation5] sm:$0xf]
    %v67 = vld [vmem:[#allocation5 + $0x4] sm:$0xf]
    %v68 = vld [vmem:[#allocation5 + $0x8] sm:$0xf]
    %v69 = vld [vmem:[#allocation5 + $0xc] sm:$0xf]
    %v70 = vld [vmem:[%s2] sm:$0x1]
    %v72 = vlaneseq
    %v73 = vshrl.u32 %v72, 7
    %v74 = vsub.s32 0, %v73
    %v75 = vrot.slane %v70, %v74
    %v81 = vunpack.c.l.b16 %v66
    %v82 = vunpack.c.l.b16 %v67
    %v83 = vunpack.c.l.b16 %v68
    %v84 = vunpack.c.l.b16 %v69
    %v85 = vpack.c.b16 %v82, %v81
    %v86 = vpack.c.b16 %v84, %v83
    %vm89 = vcmask 261120
    %v91 = vsel %vm89, %v65, 0
    %93 = vmatprep.subr.bf16.mxu0 0
    %94 = vmatpush1.bf16.msra.mxu0 0
    %95 = vmatprep.subr.bf16.mxu0 0
    %96 = vmatpush1.bf16.msra.mxu0 0
    %97 = vmatprep.subr.bf16.mxu0 0
    %98 = vmatpush1.bf16.msra.mxu0 0
    %99 = vmatprep.subr.bf16.mxu0 0
    %100 = vmatpush1.bf16.msra.mxu0 0
    %101 = vmatprep.subr.bf16.mxu0 0
    %102 = vmatpush1.bf16.msra.mxu0 0
    %103 = vmatprep.subr.bf16.mxu0 0
    %104 = vmatpush1.bf16.msra.mxu0 0
    %105 = vmatprep.subr.bf16.mxu0 0
    %106 = vmatpush1.bf16.msra.mxu0 %v86
    %107 = vmatprep.subr.bf16.mxu0 0
    %108 = vmatpush1.bf16.msra.mxu0 %v85
    %109 = vmatprep.subr.bf16.mxu0 0
    %110 = vmatpush2.bf16.msra.mxu0 0
    %111 = vmatprep.subr.bf16.mxu0 0
    %112 = vmatpush2.bf16.msra.mxu0 0
    %113 = vmatprep.subr.bf16.mxu0 0
    %114 = vmatpush2.bf16.msra.mxu0 0
    %115 = vmatprep.subr.bf16.mxu0 0
    %116 = vmatpush2.bf16.msra.mxu0 0
    %117 = vmatprep.subr.bf16.mxu0 0
    %118 = vmatpush2.bf16.msra.mxu0 0
    %119 = vmatprep.subr.bf16.mxu0 0
    %120 = vmatpush2.bf16.msra.mxu0 0
    %121 = vmatprep.subr.bf16.mxu0 0
    %122 = vmatpush2.bf16.msra.mxu0 0
    %123 = vmatprep.subr.bf16.mxu0 0
    %124 = vmatpush2.bf16.msra.mxu0 0
    %125 = vmatprep.mubr.bf16.mxu0 0
    %126 = vmatmul.mubr.bf16.gmra.mxu0 %v91
    %v127 = vpop.f32.mrf.mxu0
    %v128 = vadd.f32 %v75, %v127
    %v129 = vpop.f32.mrf.mxu0
    %v130 = vpop.f32.mrf.mxu0
    %v131 = vadd.f32 %v75, %v130
    %v132 = vpop.f32.mrf.mxu0
    %133 = vdwg.mxu0
    %v134 = vmul.f32 %v128, 0.5
    %v135 = vmul.f32 %v131, 0.5
    %v136 = vmul.f32 %v128, 0.70710677
    %v137 = vmul.f32 %v131, 0.70710677
    %v138 = verf.f32.pop %v136
    %v139 = verf.f32.pop %v137
    %v140 = vadd.f32 %v138, 1.0
    %v141 = vadd.f32 %v139, 1.0
    %v142 = vmul.f32 %v134, %v140
    %v143 = vmul.f32 %v135, %v141
    %v144 = vpack.c.bf16 %v143, %v142
    %v145 = vld [vmem:[#allocation7] sm:$0xf]
    %v146 = vld [vmem:[#allocation7 + $0x4] sm:$0xf]
    %v147 = vld [vmem:[#allocation7 + $0x8] sm:$0xf]
    %v148 = vld [vmem:[#allocation7 + $0xc] sm:$0xf]
    %v149 = vld [vmem:[#allocation7 + $0x10] sm:$0xf]
    %v150 = vld [vmem:[#allocation7 + $0x14] sm:$0xf]
    %v151 = vld [vmem:[#allocation7 + $0x18] sm:$0xf]
    %v152 = vld [vmem:[#allocation7 + $0x1c] sm:$0xf]
    %v153 = vld [vmem:[#allocation7 + $0x20] sm:$0xf]
    %v154 = vld [vmem:[#allocation7 + $0x24] sm:$0xf]
    %v155 = vld [vmem:[#allocation7 + $0x28] sm:$0xf]
    %v156 = vld [vmem:[#allocation7 + $0x2c] sm:$0xf]
    %v157 = vld [vmem:[#allocation7 + $0x30] sm:$0xf]
    %v158 = vld [vmem:[#allocation7 + $0x34] sm:$0xf]
    %v159 = vld [vmem:[#allocation7 + $0x38] sm:$0xf]
    %v160 = vld [vmem:[#allocation7 + $0x3c] sm:$0xf]
    %v161 = vld [vmem:[%s4] sm:$0x1]
    %v163 = vlaneseq
    %v164 = vshrl.u32 %v163, 7
    %v165 = vsub.s32 0, %v164
    %v166 = vrot.slane %v161, %v165
    %v184 = vunpack.c.l.b16 %v145
    %v185 = vunpack.c.l.b16 %v146
    %v186 = vunpack.c.l.b16 %v147
    %v187 = vunpack.c.l.b16 %v148
    %v188 = vunpack.c.l.b16 %v149
    %v189 = vunpack.c.l.b16 %v150
    %v190 = vunpack.c.l.b16 %v151
    %v191 = vunpack.c.l.b16 %v152
    %v192 = vunpack.c.l.b16 %v153
    %v193 = vunpack.c.l.b16 %v154
    %v194 = vunpack.c.l.b16 %v155
    %v195 = vunpack.c.l.b16 %v156
    %v196 = vunpack.c.l.b16 %v157
    %v197 = vunpack.c.l.b16 %v158
    %v198 = vunpack.c.l.b16 %v159
    %v199 = vunpack.c.l.b16 %v160
    %v200 = vpack.c.b16 %v185, %v184
    %v201 = vpack.c.b16 %v187, %v186
    %v202 = vpack.c.b16 %v189, %v188
    %v203 = vpack.c.b16 %v191, %v190
    %v204 = vpack.c.b16 %v193, %v192
    %v205 = vpack.c.b16 %v195, %v194
    %v206 = vpack.c.b16 %v197, %v196
    %v207 = vpack.c.b16 %v199, %v198
    %216 = vmatprep.subr.bf16.mxu0 0
    %217 = vmatpush1.bf16.msra.mxu0 %v207
    %218 = vmatprep.subr.bf16.mxu0 0
    %219 = vmatpush1.bf16.msra.mxu0 %v206
    %220 = vmatprep.subr.bf16.mxu0 0
    %221 = vmatpush1.bf16.msra.mxu0 %v205
    %222 = vmatprep.subr.bf16.mxu0 0
    %223 = vmatpush1.bf16.msra.mxu0 %v204
    %224 = vmatprep.subr.bf16.mxu0 0
    %225 = vmatpush1.bf16.msra.mxu0 %v203
    %226 = vmatprep.subr.bf16.mxu0 0
    %227 = vmatpush1.bf16.msra.mxu0 %v202
    %228 = vmatprep.subr.bf16.mxu0 0
    %229 = vmatpush1.bf16.msra.mxu0 %v201
    %230 = vmatprep.subr.bf16.mxu0 0
    %231 = vmatpush1.bf16.msra.mxu0 %v200
    %232 = vmatprep.subr.bf16.mxu0 0
    %233 = vmatpush2.bf16.msra.mxu0 0
    %234 = vmatprep.subr.bf16.mxu0 0
    %235 = vmatpush2.bf16.msra.mxu0 0
    %236 = vmatprep.subr.bf16.mxu0 0
    %237 = vmatpush2.bf16.msra.mxu0 0
    %238 = vmatprep.subr.bf16.mxu0 0
    %239 = vmatpush2.bf16.msra.mxu0 0
    %240 = vmatprep.subr.bf16.mxu0 0
    %241 = vmatpush2.bf16.msra.mxu0 0
    %242 = vmatprep.subr.bf16.mxu0 0
    %243 = vmatpush2.bf16.msra.mxu0 0
    %244 = vmatprep.subr.bf16.mxu0 0
    %245 = vmatpush2.bf16.msra.mxu0 0
    %246 = vmatprep.subr.bf16.mxu0 0
    %247 = vmatpush2.bf16.msra.mxu0 0
    %248 = vmatprep.mubr.bf16.mxu0 0
    %249 = vmatmul.mubr.bf16.gmra.mxu0 %v144
    %v250 = vpop.f32.mrf.mxu0
    %v251 = vadd.f32 %v166, %v250
    %v252 = vpop.f32.mrf.mxu0
    %v253 = vpop.f32.mrf.mxu0
    %v254 = vadd.f32 %v166, %v253
    %v255 = vpop.f32.mrf.mxu0
    %256 = vdwg.mxu0
    %257 = vst [vmem:[#allocation8] sm:$0xff] %v251
    %258 = vst [vmem:[#allocation8 + $0x8] sm:$0xff] %v254
    // Predicated region
    $region34: #{tpu_custom_call.1} parent=1 // pred_check
      _
    $region35: #{tpu_custom_call.1} parent=1 // pred_check_branch
      %260 = sbr.rel (0) target = $region37
    $region36: #{tpu_custom_call.1} parent=1 // pred_region
      %s262 = ssub.s32 256, 256
      %263 = vsyncadd [#allocation4], %s262
      %s264 = sshll.u32 [#allocation8], 4
      %s265 = int_to_ptr.vmem [resolvable:$true] %s264
      %270 = dma.vmem_to_hbm [thread:$0]  %s265, 256, %s5, [#allocation4], 128, 128, 8
    $region37: #{tpu_custom_call.1} parent=1 // pred_fallthru
      _
    // Predicated region
    $region38: #{tpu_custom_call.1} parent=1 // pred_check
      _
    $region39: #{tpu_custom_call.1} parent=1 // pred_check_branch
      %272 = sbr.rel (0) target = $region41
    $region40: #{tpu_custom_call.1} parent=1 // pred_region
      %273 = dma.done [#allocation4], 256
    $region41: #{tpu_custom_call.1} parent=1 // pred_fallthru
      _
    %274 = vsyncpa [#allocation3], 1
    %275 = vsyncpa [#allocation6], 1
    %276 = vsyncpa [#allocation4], 1

// kernel: tpu_custom_call.1
$region0: #{tpu_custom_call.1}
  #allocation0 [shape = 'u32[]', space=smem, size = 0x4, offset = 0x4, fixed_abs, tag = 'smem constant byte address 0x4 - core index']
  #allocation1 [shape = 'u32[144,128]{1,0:T(1,128)}', space=vmem, size = 0x12000, scoped, tag = 'internal scratch']
  %s0 = inlined_call_operand.hbm [shape: f32[16,32], index: 0, kind: input, shape index: {}]
  %s1 = inlined_call_operand.hbm [shape: bf16[32,128], index: 1, kind: input, shape index: {}]
  %s2 = inlined_call_operand.vmem [shape: f32[1,128], index: 2, kind: input, shape index: {}]
  %s3 = inlined_call_operand.hbm [shape: bf16[128,128], index: 3, kind: input, shape index: {}]
  %s4 = inlined_call_operand.vmem [shape: f32[1,128], index: 4, kind: input, shape index: {}]
  %s5 = inlined_call_operand.hbm [shape: f32[16,128], index: 5, kind: output, shape index: {}]
  %s6 = sld [smem:[#allocation0]]
  $region42: #{tpu_custom_call.1} parent=0
    _
  %s8 = ssub.s32 1, %s6
  %s9 = scalar_select 0, %s8, %s6
  $region1: #{tpu_custom_call.1} parent=0
    #allocation2 [shape = 'u8[8192]{0}', space=vmem, size = 0x2000, scoped, tag = 'input window, operand 0, single buffered']
    #allocation3 [shape = 's32[1]{0}', space=sflag, size = 0x4, scoped, tag = 'scoped memory for tpu_custom_call.1']
    #allocation4 [shape = 's32[1]{0}', space=sflag, size = 0x4, scoped, tag = 'scoped memory for tpu_custom_call.1']
    #allocation5 [shape = 'u8[8192]{0}', space=vmem, size = 0x2000, scoped, tag = 'input window, operand 1, single buffered']
    #allocation6 [shape = 's32[1]{0}', space=sflag, size = 0x4, scoped, tag = 'scoped memory for tpu_custom_call.1']
    #allocation7 [shape = 'u8[32768]{0}', space=vmem, size = 0x8000, scoped, tag = 'input window, operand 3, single buffered']
    #allocation8 [shape = 'u8[8192]{0}', space=vmem, size = 0x2000, scoped, tag = 'output window, operand 0, single buffered']
    %10 = vsyncpa [#allocation3], 0
    %11 = vsyncpa [#allocation6], 0
    %12 = vsyncpa [#allocation4], 0
    // Predicated region
    $region2: #{tpu_custom_call.1} parent=1 // pred_check
      _
    $region3: #{tpu_custom_call.1} parent=1 // pred_check_branch
      %14 = sbr.rel (0) target = $region5
    $region4: #{tpu_custom_call.1} parent=1 // pred_region
      %s16 = ssub.s32 256, 256
      %17 = vsyncadd [#allocation3], %s16
      %s18 = sshll.u32 [#allocation2], 4
      %s19 = int_to_ptr.vmem [resolvable:$true] %s18
      %24 = dma.hbm_to_vmem [thread:$0]  %s0, 256, %s19, [#allocation3], 128, 128, 8
    $region5: #{tpu_custom_call.1} parent=1 // pred_fallthru
      _
    // Predicated region
    $region6: #{tpu_custom_call.1} parent=1 // pred_check
      _
    $region7: #{tpu_custom_call.1} parent=1 // pred_check_branch
      %26 = sbr.rel (0) target = $region9
    $region8: #{tpu_custom_call.1} parent=1 // pred_region
      %s28 = ssub.s32 256, 256
      %29 = vsyncadd [#allocation6], %s28
      %s30 = sshll.u32 [#allocation5], 4
      %s31 = int_to_ptr.vmem [resolvable:$true] %s30
      %36 = dma.hbm_to_vmem [thread:$0]  %s1, 256, %s31, [#allocation6], 64, 64, 4
    $region9: #{tpu_custom_call.1} parent=1 // pred_fallthru
      _
    // Predicated region
    $region10: #{tpu_custom_call.1} parent=1 // pred_check
      _
    $region11: #{tpu_custom_call.1} parent=1 // pred_check_branch
      %38 = sbr.rel (0) target = $region13
    $region12: #{tpu_custom_call.1} parent=1 // pred_region
      _
    $region13: #{tpu_custom_call.1} parent=1 // pred_fallthru
      _
    // Predicated region
    $region14: #{tpu_custom_call.1} parent=1 // pred_check
      _
    $region15: #{tpu_custom_call.1} parent=1 // pred_check_branch
      %40 = sbr.rel (0) target = $region17
    $region16: #{tpu_custom_call.1} parent=1 // pred_region
      %s42 = ssub.s32 1024, 1024
      %43 = vsyncadd [#allocation6], %s42
      %s44 = sshll.u32 [#allocation7], 4
      %s45 = int_to_ptr.vmem [resolvable:$true] %s44
      %50 = dma.hbm_to_vmem [thread:$0]  %s3, 1024, %s45, [#allocation6], 64, 64, 4
    $region17: #{tpu_custom_call.1} parent=1 // pred_fallthru
      _
    // Predicated region
    $region18: #{tpu_custom_call.1} parent=1 // pred_check
      _
    $region19: #{tpu_custom_call.1} parent=1 // pred_check_branch
      %52 = sbr.rel (0) target = $region21
    $region20: #{tpu_custom_call.1} parent=1 // pred_region
      _
    $region21: #{tpu_custom_call.1} parent=1 // pred_fallthru
      _
    // Predicated region
    $region22: #{tpu_custom_call.1} parent=1 // pred_check
      _
    $region23: #{tpu_custom_call.1} parent=1 // pred_check_branch
      %54 = sbr.rel (0) target = $region25
    $region24: #{tpu_custom_call.1} parent=1 // pred_region
      %55 = dma.done [#allocation3], 256
    $region25: #{tpu_custom_call.1} parent=1 // pred_fallthru
      _
    // Predicated region
    $region26: #{tpu_custom_call.1} parent=1 // pred_check
      _
    $region27: #{tpu_custom_call.1} parent=1 // pred_check_branch
      %57 = sbr.rel (0) target = $region29
    $region28: #{tpu_custom_call.1} parent=1 // pred_region
      %58 = dma.done [#allocation6], 256
    $region29: #{tpu_custom_call.1} parent=1 // pred_fallthru
      _
    // Predicated region
    $region30: #{tpu_custom_call.1} parent=1 // pred_check
      _
    $region31: #{tpu_custom_call.1} parent=1 // pred_check_branch
      %60 = sbr.rel (0) target = $region33
    $region32: #{tpu_custom_call.1} parent=1 // pred_region
      %61 = dma.done [#allocation6], 1024
    $region33: #{tpu_custom_call.1} parent=1 // pred_fallthru
      _
    %v63 = vld [vmem:[#allocation2] sm:$0xff]
    %v64 = vld [vmem:[#allocation2 + $0x8] sm:$0xff]
    %v65 = vpack.c.bf16 %v64, %v63
    %v66 = vld [vmem:[#allocation5] sm:$0xf]
    %v67 = vld [vmem:[#allocation5 + $0x4] sm:$0xf]
    %v68 = vld [vmem:[#allocation5 + $0x8] sm:$0xf]
    %v69 = vld [vmem:[#allocation5 + $0xc] sm:$0xf]
    %v70 = vld [vmem:[%s2] sm:$0x1]
    %v72 = vlaneseq
    %v73 = vshrl.u32 %v72, 7
    %v74 = vsub.s32 0, %v73
    %v75 = vrot.slane %v70, %v74
    %v81 = vunpack.c.l.b16 %v66
    %v82 = vunpack.c.l.b16 %v67
    %v83 = vunpack.c.l.b16 %v68
    %v84 = vunpack.c.l.b16 %v69
    %v85 = vpack.c.b16 %v82, %v81
    %v86 = vpack.c.b16 %v84, %v83
    %vm89 = vcmask 261120
    %v91 = vsel %vm89, %v65, 0
    %93 = vmatprep.subr.bf16.mxu0 0
    %94 = vmatpush1.bf16.msra.mxu0 0
    %95 = vmatprep.subr.bf16.mxu0 0
    %96 = vmatpush1.bf16.msra.mxu0 0
    %97 = vmatprep.subr.bf16.mxu0 0
    %98 = vmatpush1.bf16.msra.mxu0 0
    %99 = vmatprep.subr.bf16.mxu0 0
    %100 = vmatpush1.bf16.msra.mxu0 0
    %101 = vmatprep.subr.bf16.mxu0 0
    %102 = vmatpush1.bf16.msra.mxu0 0
    %103 = vmatprep.subr.bf16.mxu0 0
    %104 = vmatpush1.bf16.msra.mxu0 0
    %105 = vmatprep.subr.bf16.mxu0 0
    %106 = vmatpush1.bf16.msra.mxu0 %v86
    %107 = vmatprep.subr.bf16.mxu0 0
    %108 = vmatpush1.bf16.msra.mxu0 %v85
    %109 = vmatprep.subr.bf16.mxu0 0
    %110 = vmatpush2.bf16.msra.mxu0 0
    %111 = vmatprep.subr.bf16.mxu0 0
    %112 = vmatpush2.bf16.msra.mxu0 0
    %113 = vmatprep.subr.bf16.mxu0 0
    %114 = vmatpush2.bf16.msra.mxu0 0
    %115 = vmatprep.subr.bf16.mxu0 0
    %116 = vmatpush2.bf16.msra.mxu0 0
    %117 = vmatprep.subr.bf16.mxu0 0
    %118 = vmatpush2.bf16.msra.mxu0 0
    %119 = vmatprep.subr.bf16.mxu0 0
    %120 = vmatpush2.bf16.msra.mxu0 0
    %121 = vmatprep.subr.bf16.mxu0 0
    %122 = vmatpush2.bf16.msra.mxu0 0
    %123 = vmatprep.subr.bf16.mxu0 0
    %124 = vmatpush2.bf16.msra.mxu0 0
    %125 = vmatprep.mubr.bf16.mxu0 0
    %126 = vmatmul.mubr.bf16.gmra.mxu0 %v91
    %v127 = vpop.f32.mrf.mxu0
    %v128 = vadd.f32 %v75, %v127
    %v129 = vpop.f32.mrf.mxu0
    %v130 = vpop.f32.mrf.mxu0
    %v131 = vadd.f32 %v75, %v130
    %v132 = vpop.f32.mrf.mxu0
    %133 = vdwg.mxu0
    %v134 = vmul.f32 %v128, 0.5
    %v135 = vmul.f32 %v131, 0.5
    %v136 = vmul.f32 %v128, 0.70710677
    %v137 = vmul.f32 %v131, 0.70710677
    %v138 = verf.f32.pop %v136
    %v139 = verf.f32.pop %v137
    %v140 = vadd.f32 %v138, 1.0
    %v141 = vadd.f32 %v139, 1.0
    %v142 = vmul.f32 %v134, %v140
    %v143 = vmul.f32 %v135, %v141
    %v144 = vpack.c.bf16 %v143, %v142
    %v145 = vld [vmem:[#allocation7] sm:$0xf]
    %v146 = vld [vmem:[#allocation7 + $0x4] sm:$0xf]
    %v147 = vld [vmem:[#allocation7 + $0x8] sm:$0xf]
    %v148 = vld [vmem:[#allocation7 + $0xc] sm:$0xf]
    %v149 = vld [vmem:[#allocation7 + $0x10] sm:$0xf]
    %v150 = vld [vmem:[#allocation7 + $0x14] sm:$0xf]
    %v151 = vld [vmem:[#allocation7 + $0x18] sm:$0xf]
    %v152 = vld [vmem:[#allocation7 + $0x1c] sm:$0xf]
    %v153 = vld [vmem:[#allocation7 + $0x20] sm:$0xf]
    %v154 = vld [vmem:[#allocation7 + $0x24] sm:$0xf]
    %v155 = vld [vmem:[#allocation7 + $0x28] sm:$0xf]
    %v156 = vld [vmem:[#allocation7 + $0x2c] sm:$0xf]
    %v157 = vld [vmem:[#allocation7 + $0x30] sm:$0xf]
    %v158 = vld [vmem:[#allocation7 + $0x34] sm:$0xf]
    %v159 = vld [vmem:[#allocation7 + $0x38] sm:$0xf]
    %v160 = vld [vmem:[#allocation7 + $0x3c] sm:$0xf]
    %v161 = vld [vmem:[%s4] sm:$0x1]
    %v163 = vlaneseq
    %v164 = vshrl.u32 %v163, 7
    %v165 = vsub.s32 0, %v164
    %v166 = vrot.slane %v161, %v165
    %v184 = vunpack.c.l.b16 %v145
    %v185 = vunpack.c.l.b16 %v146
    %v186 = vunpack.c.l.b16 %v147
    %v187 = vunpack.c.l.b16 %v148
    %v188 = vunpack.c.l.b16 %v149
    %v189 = vunpack.c.l.b16 %v150
    %v190 = vunpack.c.l.b16 %v151
    %v191 = vunpack.c.l.b16 %v152
    %v192 = vunpack.c.l.b16 %v153
    %v193 = vunpack.c.l.b16 %v154
    %v194 = vunpack.c.l.b16 %v155
    %v195 = vunpack.c.l.b16 %v156
    %v196 = vunpack.c.l.b16 %v157
    %v197 = vunpack.c.l.b16 %v158
    %v198 = vunpack.c.l.b16 %v159
    %v199 = vunpack.c.l.b16 %v160
    %v200 = vpack.c.b16 %v185, %v184
    %v201 = vpack.c.b16 %v187, %v186
    %v202 = vpack.c.b16 %v189, %v188
    %v203 = vpack.c.b16 %v191, %v190
    %v204 = vpack.c.b16 %v193, %v192
    %v205 = vpack.c.b16 %v195, %v194
    %v206 = vpack.c.b16 %v197, %v196
    %v207 = vpack.c.b16 %v199, %v198
    %216 = vmatprep.subr.bf16.mxu0 0
    %217 = vmatpush1.bf16.msra.mxu0 %v207
    %218 = vmatprep.subr.bf16.mxu0 0
    %219 = vmatpush1.bf16.msra.mxu0 %v206
    %220 = vmatprep.subr.bf16.mxu0 0
    %221 = vmatpush1.bf16.msra.mxu0 %v205
    %222 = vmatprep.subr.bf16.mxu0 0
    %223 = vmatpush1.bf16.msra.mxu0 %v204
    %224 = vmatprep.subr.bf16.mxu0 0
    %225 = vmatpush1.bf16.msra.mxu0 %v203
    %226 = vmatprep.subr.bf16.mxu0 0
    %227 = vmatpush1.bf16.msra.mxu0 %v202
    %228 = vmatprep.subr.bf16.mxu0 0
    %229 = vmatpush1.bf16.msra.mxu0 %v201
    %230 = vmatprep.subr.bf16.mxu0 0
    %231 = vmatpush1.bf16.msra.mxu0 %v200
    %232 = vmatprep.subr.bf16.mxu0 0
    %233 = vmatpush2.bf16.msra.mxu0 0
    %234 = vmatprep.subr.bf16.mxu0 0
    %235 = vmatpush2.bf16.msra.mxu0 0
    %236 = vmatprep.subr.bf16.mxu0 0
    %237 = vmatpush2.bf16.msra.mxu0 0
    %238 = vmatprep.subr.bf16.mxu0 0
    %239 = vmatpush2.bf16.msra.mxu0 0
    %240 = vmatprep.subr.bf16.mxu0 0
    %241 = vmatpush2.bf16.msra.mxu0 0
    %242 = vmatprep.subr.bf16.mxu0 0
    %243 = vmatpush2.bf16.msra.mxu0 0
    %244 = vmatprep.subr.bf16.mxu0 0
    %245 = vmatpush2.bf16.msra.mxu0 0
    %246 = vmatprep.subr.bf16.mxu0 0
    %247 = vmatpush2.bf16.msra.mxu0 0
    %248 = vmatprep.mubr.bf16.mxu0 0
    %249 = vmatmul.mubr.bf16.gmra.mxu0 %v144
    %v250 = vpop.f32.mrf.mxu0
    %v251 = vadd.f32 %v166, %v250
    %v252 = vpop.f32.mrf.mxu0
    %v253 = vpop.f32.mrf.mxu0
    %v254 = vadd.f32 %v166, %v253
    %v255 = vpop.f32.mrf.mxu0
    %256 = vdwg.mxu0
    %257 = vst [vmem:[#allocation8] sm:$0xff] %v251
    %258 = vst [vmem:[#allocation8 + $0x8] sm:$0xff] %v254
    // Predicated region
    $region34: #{tpu_custom_call.1} parent=1 // pred_check
      _
    $region35: #{tpu_custom_call.1} parent=1 // pred_check_branch
      %260 = sbr.rel (0) target = $region37
    $region36: #{tpu_custom_call.1} parent=1 // pred_region
      %s262 = ssub.s32 256, 256
      %263 = vsyncadd [#allocation4], %s262
      %s264 = sshll.u32 [#allocation8], 4
      %s265 = int_to_ptr.vmem [resolvable:$true] %s264
      %270 = dma.vmem_to_hbm [thread:$0]  %s265, 256, %s5, [#allocation4], 128, 128, 8
    $region37: #{tpu_custom_call.1} parent=1 // pred_fallthru
      _
    // Predicated region
    $region38: #{tpu_custom_call.1} parent=1 // pred_check
      _
    $region39: #{tpu_custom_call.1} parent=1 // pred_check_branch
      %272 = sbr.rel (0) target = $region41
    $region40: #{tpu_custom_call.1} parent=1 // pred_region
      %273 = dma.done [#allocation4], 256
    $region41: #{tpu_custom_call.1} parent=1 // pred_fallthru
      _
    %274 = vsyncpa [#allocation3], 1
    %275 = vsyncpa [#allocation6], 1
    %276 = vsyncpa [#allocation4], 1

</llo_original>
